<compile_context>
chip_gen: v5e
topology: v5e:2x2
jax: 0.10.0
libtpu: 0.0.40
codegen_flags: <defaults>
</compile_context>

<pallas_src>
import math
import functools

import numpy as np
import jax
import jax.numpy as jnp
from jax import lax
from jax.experimental import pallas as pl
from jax.experimental.pallas import tpu as pltpu


# ----------------------------------------------------------------------------
# Host-side tables.
# ----------------------------------------------------------------------------
def rope_tables(seq_len, cd):
    """cos_pos / sin_pos of shape (T, cd), matching the torch reference
    (sin/cos interleaved then repeat_interleave(2))."""
    pos = np.arange(seq_len, dtype=np.float32)[:, None]                  # (T, 1)
    idx = np.arange(cd // 2, dtype=np.float32)                           # (cd/2,)
    inv = np.power(10000.0, -2.0 * idx / cd)                             # (cd/2,)
    ang = pos * inv                                                      # (T, cd/2)
    cos_pos = np.repeat(np.cos(ang), 2, axis=-1)                         # (T, cd)
    sin_pos = np.repeat(np.sin(ang), 2, axis=-1)                         # (T, cd)
    return cos_pos, sin_pos


def qk_permutation(heads, cd):
    """Column permutation: interleaved [h0_q,h0_k,h1_q,h1_k,...] -> [Q_all | K_all]."""
    perm_q = [np.arange(i * 2 * cd, i * 2 * cd + cd) for i in range(heads)]
    perm_k = [np.arange(i * 2 * cd + cd, (i + 1) * 2 * cd) for i in range(heads)]
    return np.concatenate(perm_q + perm_k)


# ----------------------------------------------------------------------------
# Pallas kernel.  grid = (B, num_chunks); B "parallel", chunk axis "arbitrary".
# At chunk==0 the projection + RoPE + masks are computed once per batch element
# into persistent VMEM scratch; every chunk step then does HEAD_CHUNK bf16 MXU
# matmuls and (T, T) subtracts.
# ----------------------------------------------------------------------------
def global_pointer_kernel(h_ref, w_ref, b_ref, cos_ref, sin_ref,
                          mrow_ref, mcol_ref, o_ref,
                          q_scr, k_scr, pen_scr,
                          *, heads, cat_dim, head_chunk):
    c = pl.program_id(1)
    T = h_ref.shape[1]
    HC = heads * cat_dim
    W = head_chunk * cat_dim
    num_chunks = heads // head_chunk
    inv_scale = 1.0 / math.sqrt(cat_dim)
    big = 1e12

    @pl.when(c == 0)
    def _():
        # --- dense projection: bf16 MXU operands, f32 accumulation -----------
        h = h_ref[0]                                           # (T, D) bf16
        proj = jnp.dot(h, w_ref[...],                          # (T, 2*HC) f32
                       preferred_element_type=jnp.float32) + b_ref[...]
        qs = proj[:, :HC]                                      # (T, HC)  Q slab
        ks = proj[:, HC:]                                      # (T, HC)  K slab

        cos = cos_ref[...]                                     # (T, HC)
        sin = sin_ref[...]                                     # (T, HC)

        # --- RoPE pair-rotation via XLU rolls + lane-parity select ------------
        # rotate(x)[..., 2i]   = -x[..., 2i+1]
        # rotate(x)[..., 2i+1] =  x[..., 2i]
        # Wrap-around lanes of the rolls are never selected (pairs never cross
        # head boundaries), so rolling over the whole HC slab is safe.
        lane = lax.broadcasted_iota(jnp.int32, (T, HC), 1)
        even = (lane % 2) == 0

        def rotate(x):
            nxt = pltpu.roll(x, shift=HC - 1, axis=1)          # x[..., e+1] at lane e
            prv = pltpu.roll(x, shift=1, axis=1)               # x[..., e-1] at lane e
            return jnp.where(even, -nxt, prv)

        pad_row = mrow_ref[0]                                  # (1, T) key-axis pad
        pad_col = mcol_ref[0]                                  # (T, 1) same mask, col form

        # fold 1/sqrt(Cd) into Q, key pad mask into K (exact vs. reference)
        q_rot = (qs * cos + rotate(qs) * sin) * inv_scale      # (T, HC) f32
        k_rot = (ks * cos + rotate(ks) * sin) * pad_col        # (T, HC) f32

        # stash lane-dense bf16 chunk slabs (leading dim indexed by chunk id)
        for ci in range(num_chunks):
            lo = ci * W
            q_scr[ci] = q_rot[:, lo:lo + W].astype(jnp.bfloat16)
            k_scr[ci] = k_rot[:, lo:lo + W].astype(jnp.bfloat16)

        # additive penalty, built once: ((1 - pad) + strict_tril) * 1e12 / sqrt(Cd)
        row = lax.broadcasted_iota(jnp.int32, (T, T), 0)
        col = lax.broadcasted_iota(jnp.int32, (T, T), 1)
        tril = (row > col).astype(jnp.float32)
        pen_scr[...] = ((1.0 - pad_row) + tril) * (big * inv_scale)

    # --- per-chunk hot path: HEAD_CHUNK MXU matmuls + VPU subtracts -----------
    qc = q_scr[c]                                              # (T, W) bf16
    kc = k_scr[c]                                              # (T, W) bf16
    pen = pen_scr[...]                                         # (T, T) f32
    for hh in range(head_chunk):
        lo = hh * cat_dim
        scores = lax.dot_general(                              # (T, T) f32
            qc[:, lo:lo + cat_dim], kc[:, lo:lo + cat_dim],
            dimension_numbers=(((1,), (1,)), ((), ())),
            preferred_element_type=jnp.float32)
        o_ref[0, hh] = (scores - pen).astype(o_ref.dtype)


# ----------------------------------------------------------------------------
# Wrapper.
# ----------------------------------------------------------------------------
def _pick_head_chunk(heads, T, out_itemsize, budget_bytes=16 * 1024 * 1024):
    """Largest divisor of `heads` whose double-buffered output block fits budget."""
    for c in range(heads, 0, -1):
        if heads % c == 0 and 2 * c * T * T * out_itemsize <= budget_bytes:
            return c
    return 1


def _vmem_limit_bytes(T, D, N, HC, W, num_chunks, head_chunk, out_itemsize):
    dbl = 2  # default double-buffering of pipelined operands
    inputs = dbl * (T * D * 2            # hidden (bf16)
                    + D * N * 2          # weight (bf16)
                    + N * 4              # bias (f32)
                    + 2 * T * HC * 4     # cos + sin (f32)
                    + 2 * T * 128 * 4)   # pad masks (lane-padded, f32)
    outputs = dbl * head_chunk * T * T * out_itemsize
    scratch = 2 * num_chunks * T * W * 2 + T * T * 4
    total = inputs + outputs + scratch
    # generous headroom for compiler temporaries; clamp to a sane range.
    return int(min(max(2 * total + (4 << 20), 16 << 20), 100 << 20))


def global_pointer_forward(hidden_states, weight, bias, attention_mask,
                           heads, cat_dim, head_chunk=None,
                           out_dtype=jnp.float32):
    B, T, D = hidden_states.shape
    HC = heads * cat_dim
    N = 2 * HC
    assert weight.shape == (D, N)

    out_itemsize = jnp.dtype(out_dtype).itemsize
    if head_chunk is None:
        head_chunk = _pick_head_chunk(heads, T, out_itemsize)
    assert heads % head_chunk == 0
    num_chunks = heads // head_chunk
    W = head_chunk * cat_dim

    # Reorder dense columns/bias into [Q_all | K_all] slab layout (host side).
    perm = qk_permutation(heads, cat_dim)
    w_r = jnp.asarray(weight)[:, perm].astype(jnp.bfloat16)            # (D, N) bf16
    b_r = jnp.asarray(bias)[perm].reshape(1, N).astype(jnp.float32)    # (1, N)

    cos_np, sin_np = rope_tables(T, cat_dim)
    cos_full = jnp.asarray(np.tile(cos_np, (1, heads)))                # (T, HC)
    sin_full = jnp.asarray(np.tile(sin_np, (1, heads)))                # (T, HC)

    # Kernel input stream pre-cast to bf16 (halves HBM->VMEM traffic).
    h_bf16 = jnp.asarray(hidden_states).astype(jnp.bfloat16)

    am = jnp.asarray(attention_mask).astype(jnp.float32)
    mask_row = am.reshape(B, 1, T)    # key axis (penalty columns)
    mask_col = am.reshape(B, T, 1)    # column form (folded into K rows); tiny input,
                                      # kept explicit to avoid an in-kernel transpose.

    kernel = functools.partial(global_pointer_kernel, heads=heads,
                               cat_dim=cat_dim, head_chunk=head_chunk)

    vmem_limit = _vmem_limit_bytes(T, D, N, HC, W, num_chunks, head_chunk,
                                   out_itemsize)

    return pl.pallas_call(
        kernel,
        out_shape=jax.ShapeDtypeStruct((B, heads, T, T), out_dtype),
        grid_spec=pltpu.PrefetchScalarGridSpec(
            num_scalar_prefetch=0,
            grid=(B, num_chunks),
            in_specs=[
                pl.BlockSpec((1, T, D), lambda b, c: (b, 0, 0)),     # hidden (bf16)
                pl.BlockSpec((D, N), lambda b, c: (0, 0)),           # dense weight (bf16)
                pl.BlockSpec((1, N), lambda b, c: (0, 0)),           # dense bias
                pl.BlockSpec((T, HC), lambda b, c: (0, 0)),          # cos (tiled over heads)
                pl.BlockSpec((T, HC), lambda b, c: (0, 0)),          # sin (tiled over heads)
                pl.BlockSpec((1, 1, T), lambda b, c: (b, 0, 0)),     # pad mask, row form
                pl.BlockSpec((1, T, 1), lambda b, c: (b, 0, 0)),     # pad mask, col form
            ],
            out_specs=pl.BlockSpec((1, head_chunk, T, T),
                                   lambda b, c: (b, c, 0, 0)),
            scratch_shapes=[
                pltpu.VMEM((num_chunks, T, W), jnp.bfloat16),        # q chunk slabs (scaled)
                pltpu.VMEM((num_chunks, T, W), jnp.bfloat16),        # k chunk slabs (padded)
                pltpu.VMEM((T, T), jnp.float32),                     # additive penalty
            ],
        ),
        compiler_params=pltpu.CompilerParams(
            # chunk axis MUST stay innermost + "arbitrary": scratch is filled at
            # chunk==0 and reused by later chunks of the same batch element.
            dimension_semantics=("parallel", "arbitrary"),
            vmem_limit_bytes=vmem_limit,
        ),
    )(h_bf16, w_r, b_r, cos_full, sin_full, mask_row, mask_col)


# ----------------------------------------------------------------------------
# Pure-JAX reference (mirrors the torch forward, starting from hidden_states).
# ----------------------------------------------------------------------------
def reference_forward(hidden_states, weight, bias, attention_mask, heads, cat_dim):
    B, T, D = hidden_states.shape
    x = hidden_states @ weight + bias                             # (B, T, H*2*Cd)
    x = x.reshape(B, T, heads, 2 * cat_dim)
    qw, kw = x[..., :cat_dim], x[..., cat_dim:]

    cos_np, sin_np = rope_tables(T, cat_dim)
    cos_pos = jnp.asarray(cos_np)[None, :, None, :]
    sin_pos = jnp.asarray(sin_np)[None, :, None, :]

    def rotate(t):
        t2 = jnp.stack([-t[..., 1::2], t[..., ::2]], axis=-1)
        return t2.reshape(t.shape)

    qw = qw * cos_pos + rotate(qw) * sin_pos
    kw = kw * cos_pos + rotate(kw) * sin_pos

    logits = jnp.einsum('bmhd,bnhd->bhmn', qw, kw)
    pad = attention_mask[:, None, None, :].astype(jnp.float32)
    logits = logits * pad - (1.0 - pad) * 1e12
    tril = jnp.tril(jnp.ones((T, T), jnp.float32), -1)[None, None]
    logits = logits - tril * 1e12
    return logits / math.sqrt(cat_dim)


# ----------------------------------------------------------------------------
if __name__ == "__main__":
    B, T, D = 2, 8, 32          # batch, seq, hidden
    HEADS, CD = 4, 32           # category_heads, category_dim (HC = 128 lanes)
    N = HEADS * 2 * CD          # = 256

    key = jax.random.PRNGKey(0)
    k1, k2, k3 = jax.random.split(key, 3)
    hidden_states = jax.random.normal(k1, (B, T, D), dtype=jnp.float32)
    weight = 0.05 * jax.random.normal(k2, (D, N), dtype=jnp.float32)
    bias = 0.05 * jax.random.normal(k3, (N,), dtype=jnp.float32)

    lens = jnp.array([T, T - 3])
    attention_mask = (jnp.arange(T)[None, :] < lens[:, None]).astype(jnp.float32)

    out = global_pointer_forward(hidden_states, weight, bias, attention_mask,
                                 heads=HEADS, cat_dim=CD)
    out = jax.block_until_ready(out)

    ref = reference_forward(hidden_states, weight, bias, attention_mask,
                            heads=HEADS, cat_dim=CD)
    np.testing.assert_allclose(np.asarray(out), np.asarray(ref),
                               rtol=1e-2, atol=1e-2)
    print("KERNEL_OK")
</pallas_src>

<mosaic_0001>
module attributes {stable_mosaic.version = 11 : i64} {
  func.func @global_pointer_kernel(%arg0: i32, %arg1: i32, %arg2: memref<1x8x32xbf16, #tpu.memory_space<vmem>>, %arg3: memref<32x256xbf16, #tpu.memory_space<vmem>>, %arg4: memref<1x256xf32, #tpu.memory_space<vmem>>, %arg5: memref<8x128xf32, #tpu.memory_space<vmem>>, %arg6: memref<8x128xf32, #tpu.memory_space<vmem>>, %arg7: memref<1x1x8xf32, #tpu.memory_space<vmem>>, %arg8: memref<1x8x1xf32, #tpu.memory_space<vmem>>, %arg9: memref<1x4x8x8xf32, #tpu.memory_space<vmem>>, %arg10: memref<1x8x128xbf16, #tpu.memory_space<vmem>>, %arg11: memref<1x8x128xbf16, #tpu.memory_space<vmem>>, %arg12: memref<8x8xf32, #tpu.memory_space<vmem>>) attributes {dimension_semantics = [#tpu.dimension_semantics<parallel>, #tpu.dimension_semantics<arbitrary>], iteration_bounds = array<i64: 2, 1>, scalar_prefetch = 0 : i64, scratch_operands = 3 : i64, tpu.core_type = #tpu.core_type<tc>, window_params = [{transform_indices = @transform_0, window_bounds = array<i64: 1, 8, 32>}, {pipeline_mode = #tpu.pipeline_mode<synchronous>, transform_indices = @transform_1, window_bounds = array<i64: 32, 256>}, {pipeline_mode = #tpu.pipeline_mode<synchronous>, transform_indices = @transform_2, window_bounds = array<i64: 1, 256>}, {pipeline_mode = #tpu.pipeline_mode<synchronous>, transform_indices = @transform_3, window_bounds = array<i64: 8, 128>}, {pipeline_mode = #tpu.pipeline_mode<synchronous>, transform_indices = @transform_4, window_bounds = array<i64: 8, 128>}, {transform_indices = @transform_5, window_bounds = array<i64: 1, 1, 8>}, {transform_indices = @transform_6, window_bounds = array<i64: 1, 8, 1>}, {transform_indices = @transform_7, window_bounds = array<i64: 1, 4, 8, 8>}]} {
    %c0_i32 = arith.constant 0 : i32
    %0 = arith.cmpi eq, %arg1, %c0_i32 : i32
    %1 = arith.extui %0 : i1 to i32
    %c0_i32_0 = arith.constant 0 : i32
    %2 = arith.cmpi ne, %1, %c0_i32_0 : i32
    scf.if %2 {
      %c0_22 = arith.constant 0 : index
      %c0_23 = arith.constant 0 : index
      %c0_24 = arith.constant 0 : index
      %38 = vector.load %arg2[%c0_22, %c0_23, %c0_24] : memref<1x8x32xbf16, #tpu.memory_space<vmem>>, vector<1x8x32xbf16>
      %39 = vector.shape_cast %38 : vector<1x8x32xbf16> to vector<8x32xbf16>
      %c0_25 = arith.constant 0 : index
      %c0_26 = arith.constant 0 : index
      %40 = vector.load %arg3[%c0_25, %c0_26] : memref<32x256xbf16, #tpu.memory_space<vmem>>, vector<32x256xbf16>
      %cst_27 = arith.constant dense<0.000000e+00> : vector<8x256xf32>
      %41 = tpu.matmul %39, %40, %cst_27 {dimension_numbers = #tpu.dot_dimension_numbers<[1], [0], [0], [1], [0, 0, 1, 1], [], []>} : vector<8x32xbf16>, vector<32x256xbf16>, vector<8x256xf32> -> vector<8x256xf32>
      %c0_28 = arith.constant 0 : index
      %c0_29 = arith.constant 0 : index
      %42 = vector.load %arg4[%c0_28, %c0_29] : memref<1x256xf32, #tpu.memory_space<vmem>>, vector<1x256xf32>
      %43 = vector.broadcast %42 : vector<1x256xf32> to vector<8x256xf32>
      %44 = arith.addf %41, %43 : vector<8x256xf32>
      %45 = vector.extract_strided_slice %44 {offsets = [0, 0], sizes = [8, 128], strides = [1, 1]} : vector<8x256xf32> to vector<8x128xf32>
      %46 = vector.extract_strided_slice %44 {offsets = [0, 128], sizes = [8, 128], strides = [1, 1]} : vector<8x256xf32> to vector<8x128xf32>
      %c0_30 = arith.constant 0 : index
      %c0_31 = arith.constant 0 : index
      %47 = vector.load %arg5[%c0_30, %c0_31] : memref<8x128xf32, #tpu.memory_space<vmem>>, vector<8x128xf32>
      %c0_32 = arith.constant 0 : index
      %c0_33 = arith.constant 0 : index
      %48 = vector.load %arg6[%c0_32, %c0_33] : memref<8x128xf32, #tpu.memory_space<vmem>>, vector<8x128xf32>
      %49 = tpu.iota {dimensions = array<i32: 1>} : vector<8x128xi32>
      %c2_i32 = arith.constant 2 : i32
      %c0_i32_34 = arith.constant 0 : i32
      %50 = arith.cmpi eq, %c2_i32, %c0_i32_34 : i32
      %c1_i32 = arith.constant 1 : i32
      %51 = arith.select %50, %c1_i32, %c2_i32 : i32
      %52 = vector.broadcast %51 : i32 to vector<8x128xi32>
      %53 = arith.remsi %49, %52 : vector<8x128xi32>
      %c0_i32_35 = arith.constant 0 : i32
      %54 = vector.broadcast %c0_i32_35 : i32 to vector<8x128xi32>
      %55 = arith.cmpi ne, %53, %54 : vector<8x128xi32>
      %c0_i32_36 = arith.constant 0 : i32
      %56 = vector.broadcast %c0_i32_36 : i32 to vector<8x128xi32>
      %57 = arith.cmpi slt, %53, %56 : vector<8x128xi32>
      %c0_i32_37 = arith.constant 0 : i32
      %58 = arith.cmpi slt, %51, %c0_i32_37 : i32
      %59 = vector.broadcast %58 : i1 to vector<8x128xi1>
      %60 = vector.broadcast %59 : vector<8x128xi1> to vector<8x128xi1>
      %61 = arith.xori %57, %60 : vector<8x128xi1>
      %62 = arith.andi %61, %55 : vector<8x128xi1>
      %63 = vector.broadcast %51 : i32 to vector<8x128xi32>
      %64 = arith.addi %53, %63 : vector<8x128xi32>
      %65 = arith.select %62, %64, %53 : vector<8x128xi1>, vector<8x128xi32>
      %c0_i32_38 = arith.constant 0 : i32
      %66 = vector.broadcast %c0_i32_38 : i32 to vector<8x128xi32>
      %67 = arith.cmpi eq, %65, %66 : vector<8x128xi32>
      %c0_39 = arith.constant 0 : index
      %c0_40 = arith.constant 0 : index
      %c0_41 = arith.constant 0 : index
      %68 = vector.load %arg7[%c0_39, %c0_40, %c0_41] : memref<1x1x8xf32, #tpu.memory_space<vmem>>, vector<1x1x8xf32>
      %69 = vector.shape_cast %68 : vector<1x1x8xf32> to vector<1x8xf32>
      %c0_42 = arith.constant 0 : index
      %c0_43 = arith.constant 0 : index
      %c0_44 = arith.constant 0 : index
      %70 = vector.load %arg8[%c0_42, %c0_43, %c0_44] : memref<1x8x1xf32, #tpu.memory_space<vmem>>, vector<1x8x1xf32>
      %71 = vector.shape_cast %70 : vector<1x8x1xf32> to vector<8x1xf32>
      %72 = arith.mulf %45, %47 : vector<8x128xf32>
      %c127_i32 = arith.constant 127 : i32
      %73 = tpu.dynamic_rotate %45 by %c127_i32 dim 1 : vector<8x128xf32>, i32 -> vector<8x128xf32>
      %c1_i32_45 = arith.constant 1 : i32
      %74 = tpu.dynamic_rotate %45 by %c1_i32_45 dim 1 : vector<8x128xf32>, i32 -> vector<8x128xf32>
      %cst_46 = arith.constant 0.000000e+00 : f32
      %75 = vector.broadcast %cst_46 : f32 to vector<8x128xf32>
      %76 = arith.subf %75, %73 : vector<8x128xf32>
      %77 = arith.select %67, %76, %74 : vector<8x128xi1>, vector<8x128xf32>
      %78 = arith.mulf %77, %48 : vector<8x128xf32>
      %79 = arith.addf %72, %78 : vector<8x128xf32>
      %cst_47 = arith.constant 0.176776692 : f32
      %80 = vector.broadcast %cst_47 : f32 to vector<8x128xf32>
      %81 = arith.mulf %79, %80 : vector<8x128xf32>
      %82 = arith.mulf %46, %47 : vector<8x128xf32>
      %c127_i32_48 = arith.constant 127 : i32
      %83 = tpu.dynamic_rotate %46 by %c127_i32_48 dim 1 : vector<8x128xf32>, i32 -> vector<8x128xf32>
      %c1_i32_49 = arith.constant 1 : i32
      %84 = tpu.dynamic_rotate %46 by %c1_i32_49 dim 1 : vector<8x128xf32>, i32 -> vector<8x128xf32>
      %cst_50 = arith.constant 0.000000e+00 : f32
      %85 = vector.broadcast %cst_50 : f32 to vector<8x128xf32>
      %86 = arith.subf %85, %83 : vector<8x128xf32>
      %87 = arith.select %67, %86, %84 : vector<8x128xi1>, vector<8x128xf32>
      %88 = arith.mulf %87, %48 : vector<8x128xf32>
      %89 = arith.addf %82, %88 : vector<8x128xf32>
      %90 = vector.broadcast %71 : vector<8x1xf32> to vector<8x128xf32>
      %91 = arith.mulf %89, %90 : vector<8x128xf32>
      %92 = arith.truncf %81 : vector<8x128xf32> to vector<8x128xbf16>
      %c0_51 = arith.constant 0 : index
      %c0_52 = arith.constant 0 : index
      %c0_53 = arith.constant 0 : index
      %93 = vector.load %arg10[%c0_51, %c0_52, %c0_53] : memref<1x8x128xbf16, #tpu.memory_space<vmem>>, vector<1x8x128xbf16>
      %94 = vector.shape_cast %93 : vector<1x8x128xbf16> to vector<8x128xbf16>
      %95 = vector.shape_cast %92 : vector<8x128xbf16> to vector<1x8x128xbf16>
      tpu.vector_store %arg10[%c0_51, %c0_52, %c0_53], %95 {strides = array<i32>} : memref<1x8x128xbf16, #tpu.memory_space<vmem>>, vector<1x8x128xbf16>,
      %96 = arith.truncf %91 : vector<8x128xf32> to vector<8x128xbf16>
      %c0_54 = arith.constant 0 : index
      %c0_55 = arith.constant 0 : index
      %c0_56 = arith.constant 0 : index
      %97 = vector.load %arg11[%c0_54, %c0_55, %c0_56] : memref<1x8x128xbf16, #tpu.memory_space<vmem>>, vector<1x8x128xbf16>
      %98 = vector.shape_cast %97 : vector<1x8x128xbf16> to vector<8x128xbf16>
      %99 = vector.shape_cast %96 : vector<8x128xbf16> to vector<1x8x128xbf16>
      tpu.vector_store %arg11[%c0_54, %c0_55, %c0_56], %99 {strides = array<i32>} : memref<1x8x128xbf16, #tpu.memory_space<vmem>>, vector<1x8x128xbf16>,
      %100 = tpu.iota {dimensions = array<i32: 0>} : vector<8x8xi32>
      %101 = tpu.iota {dimensions = array<i32: 1>} : vector<8x8xi32>
      %102 = arith.cmpi sgt, %100, %101 : vector<8x8xi32>
      %103 = arith.extui %102 : vector<8x8xi1> to vector<8x8xi32>
      %104 = arith.sitofp %103 : vector<8x8xi32> to vector<8x8xf32>
      %cst_57 = arith.constant 1.000000e+00 : f32
      %105 = vector.broadcast %cst_57 : f32 to vector<1x8xf32>
      %106 = arith.subf %105, %69 : vector<1x8xf32>
      %107 = vector.broadcast %106 : vector<1x8xf32> to vector<8x8xf32>
      %108 = arith.addf %107, %104 : vector<8x8xf32>
      %cst_58 = arith.constant 1.76776692E+11 : f32
      %109 = vector.broadcast %cst_58 : f32 to vector<8x8xf32>
      %110 = arith.mulf %108, %109 : vector<8x8xf32>
      %c0_59 = arith.constant 0 : index
      %c0_60 = arith.constant 0 : index
      %111 = vector.load %arg12[%c0_59, %c0_60] : memref<8x8xf32, #tpu.memory_space<vmem>>, vector<8x8xf32>
      tpu.vector_store %arg12[%c0_59, %c0_60], %110 {strides = array<i32>} : memref<8x8xf32, #tpu.memory_space<vmem>>, vector<8x8xf32>,
    } else {
    }
    %3 = arith.index_cast %arg1 : i32 to index
    %c0 = arith.constant 0 : index
    %c0_1 = arith.constant 0 : index
    %4 = vector.load %arg10[%3, %c0, %c0_1] : memref<1x8x128xbf16, #tpu.memory_space<vmem>>, vector<1x8x128xbf16>
    %5 = vector.shape_cast %4 : vector<1x8x128xbf16> to vector<8x128xbf16>
    %6 = arith.index_cast %arg1 : i32 to index
    %c0_2 = arith.constant 0 : index
    %c0_3 = arith.constant 0 : index
    %7 = vector.load %arg11[%6, %c0_2, %c0_3] : memref<1x8x128xbf16, #tpu.memory_space<vmem>>, vector<1x8x128xbf16>
    %8 = vector.shape_cast %7 : vector<1x8x128xbf16> to vector<8x128xbf16>
    %c0_4 = arith.constant 0 : index
    %c0_5 = arith.constant 0 : index
    %9 = vector.load %arg12[%c0_4, %c0_5] : memref<8x8xf32, #tpu.memory_space<vmem>>, vector<8x8xf32>
    %10 = vector.extract_strided_slice %5 {offsets = [0, 0], sizes = [8, 32], strides = [1, 1]} : vector<8x128xbf16> to vector<8x32xbf16>
    %11 = vector.extract_strided_slice %8 {offsets = [0, 0], sizes = [8, 32], strides = [1, 1]} : vector<8x128xbf16> to vector<8x32xbf16>
    %cst = arith.constant dense<0.000000e+00> : vector<8x8xf32>
    %12 = tpu.matmul %10, %11, %cst {dimension_numbers = #tpu.dot_dimension_numbers<[1], [1], [0], [0], [0, 0, 1, 0], [], []>} : vector<8x32xbf16>, vector<8x32xbf16>, vector<8x8xf32> -> vector<8x8xf32>
    %13 = arith.subf %12, %9 : vector<8x8xf32>
    %c0_6 = arith.constant 0 : index
    %c0_7 = arith.constant 0 : index
    %c0_8 = arith.constant 0 : index
    %c0_9 = arith.constant 0 : index
    %14 = vector.load %arg9[%c0_6, %c0_7, %c0_8, %c0_9] : memref<1x4x8x8xf32, #tpu.memory_space<vmem>>, vector<1x1x8x8xf32>
    %15 = vector.shape_cast %14 : vector<1x1x8x8xf32> to vector<8x8xf32>
    %16 = vector.shape_cast %13 : vector<8x8xf32> to vector<1x1x8x8xf32>
    tpu.vector_store %arg9[%c0_6, %c0_7, %c0_8, %c0_9], %16 {strides = array<i32>} : memref<1x4x8x8xf32, #tpu.memory_space<vmem>>, vector<1x1x8x8xf32>,
    %17 = vector.extract_strided_slice %5 {offsets = [0, 32], sizes = [8, 32], strides = [1, 1]} : vector<8x128xbf16> to vector<8x32xbf16>
    %18 = vector.extract_strided_slice %8 {offsets = [0, 32], sizes = [8, 32], strides = [1, 1]} : vector<8x128xbf16> to vector<8x32xbf16>
    %cst_10 = arith.constant dense<0.000000e+00> : vector<8x8xf32>
    %19 = tpu.matmul %17, %18, %cst_10 {dimension_numbers = #tpu.dot_dimension_numbers<[1], [1], [0], [0], [0, 0, 1, 0], [], []>} : vector<8x32xbf16>, vector<8x32xbf16>, vector<8x8xf32> -> vector<8x8xf32>
    %20 = arith.subf %19, %9 : vector<8x8xf32>
    %c0_11 = arith.constant 0 : index
    %c1 = arith.constant 1 : index
    %c0_12 = arith.constant 0 : index
    %c0_13 = arith.constant 0 : index
    %21 = vector.load %arg9[%c0_11, %c1, %c0_12, %c0_13] : memref<1x4x8x8xf32, #tpu.memory_space<vmem>>, vector<1x1x8x8xf32>
    %22 = vector.shape_cast %21 : vector<1x1x8x8xf32> to vector<8x8xf32>
    %23 = vector.shape_cast %20 : vector<8x8xf32> to vector<1x1x8x8xf32>
    tpu.vector_store %arg9[%c0_11, %c1, %c0_12, %c0_13], %23 {strides = array<i32>} : memref<1x4x8x8xf32, #tpu.memory_space<vmem>>, vector<1x1x8x8xf32>,
    %24 = vector.extract_strided_slice %5 {offsets = [0, 64], sizes = [8, 32], strides = [1, 1]} : vector<8x128xbf16> to vector<8x32xbf16>
    %25 = vector.extract_strided_slice %8 {offsets = [0, 64], sizes = [8, 32], strides = [1, 1]} : vector<8x128xbf16> to vector<8x32xbf16>
    %cst_14 = arith.constant dense<0.000000e+00> : vector<8x8xf32>
    %26 = tpu.matmul %24, %25, %cst_14 {dimension_numbers = #tpu.dot_dimension_numbers<[1], [1], [0], [0], [0, 0, 1, 0], [], []>} : vector<8x32xbf16>, vector<8x32xbf16>, vector<8x8xf32> -> vector<8x8xf32>
    %27 = arith.subf %26, %9 : vector<8x8xf32>
    %c0_15 = arith.constant 0 : index
    %c2 = arith.constant 2 : index
    %c0_16 = arith.constant 0 : index
    %c0_17 = arith.constant 0 : index
    %28 = vector.load %arg9[%c0_15, %c2, %c0_16, %c0_17] : memref<1x4x8x8xf32, #tpu.memory_space<vmem>>, vector<1x1x8x8xf32>
    %29 = vector.shape_cast %28 : vector<1x1x8x8xf32> to vector<8x8xf32>
    %30 = vector.shape_cast %27 : vector<8x8xf32> to vector<1x1x8x8xf32>
    tpu.vector_store %arg9[%c0_15, %c2, %c0_16, %c0_17], %30 {strides = array<i32>} : memref<1x4x8x8xf32, #tpu.memory_space<vmem>>, vector<1x1x8x8xf32>,
    %31 = vector.extract_strided_slice %5 {offsets = [0, 96], sizes = [8, 32], strides = [1, 1]} : vector<8x128xbf16> to vector<8x32xbf16>
    %32 = vector.extract_strided_slice %8 {offsets = [0, 96], sizes = [8, 32], strides = [1, 1]} : vector<8x128xbf16> to vector<8x32xbf16>
    %cst_18 = arith.constant dense<0.000000e+00> : vector<8x8xf32>
    %33 = tpu.matmul %31, %32, %cst_18 {dimension_numbers = #tpu.dot_dimension_numbers<[1], [1], [0], [0], [0, 0, 1, 0], [], []>} : vector<8x32xbf16>, vector<8x32xbf16>, vector<8x8xf32> -> vector<8x8xf32>
    %34 = arith.subf %33, %9 : vector<8x8xf32>
    %c0_19 = arith.constant 0 : index
    %c3 = arith.constant 3 : index
    %c0_20 = arith.constant 0 : index
    %c0_21 = arith.constant 0 : index
    %35 = vector.load %arg9[%c0_19, %c3, %c0_20, %c0_21] : memref<1x4x8x8xf32, #tpu.memory_space<vmem>>, vector<1x1x8x8xf32>
    %36 = vector.shape_cast %35 : vector<1x1x8x8xf32> to vector<8x8xf32>
    %37 = vector.shape_cast %34 : vector<8x8xf32> to vector<1x1x8x8xf32>
    tpu.vector_store %arg9[%c0_19, %c3, %c0_20, %c0_21], %37 {strides = array<i32>} : memref<1x4x8x8xf32, #tpu.memory_space<vmem>>, vector<1x1x8x8xf32>,
    return
  }
  func.func @transform_0(%arg0: i32, %arg1: i32) -> (i32, i32, i32) {
    %c0_i32 = arith.constant 0 : i32
    %c0_i32_0 = arith.constant 0 : i32
    %c0_i32_1 = arith.constant 0 : i32
    return %arg0, %c0_i32, %c0_i32_0 : i32, i32, i32
  }
  func.func @transform_1(%arg0: i32, %arg1: i32) -> (i32, i32) {
    %c0_i32 = arith.constant 0 : i32
    %c0_i32_0 = arith.constant 0 : i32
    %c0_i32_1 = arith.constant 0 : i32
    return %c0_i32, %c0_i32_0 : i32, i32
  }
  func.func @transform_2(%arg0: i32, %arg1: i32) -> (i32, i32) {
    %c0_i32 = arith.constant 0 : i32
    %c0_i32_0 = arith.constant 0 : i32
    %c0_i32_1 = arith.constant 0 : i32
    return %c0_i32, %c0_i32_0 : i32, i32
  }
  func.func @transform_3(%arg0: i32, %arg1: i32) -> (i32, i32) {
    %c0_i32 = arith.constant 0 : i32
    %c0_i32_0 = arith.constant 0 : i32
    %c0_i32_1 = arith.constant 0 : i32
    return %c0_i32, %c0_i32_0 : i32, i32
  }
  func.func @transform_4(%arg0: i32, %arg1: i32) -> (i32, i32) {
    %c0_i32 = arith.constant 0 : i32
    %c0_i32_0 = arith.constant 0 : i32
    %c0_i32_1 = arith.constant 0 : i32
    return %c0_i32, %c0_i32_0 : i32, i32
  }
  func.func @transform_5(%arg0: i32, %arg1: i32) -> (i32, i32, i32) {
    %c0_i32 = arith.constant 0 : i32
    %c0_i32_0 = arith.constant 0 : i32
    %c0_i32_1 = arith.constant 0 : i32
    return %arg0, %c0_i32, %c0_i32_0 : i32, i32, i32
  }
  func.func @transform_6(%arg0: i32, %arg1: i32) -> (i32, i32, i32) {
    %c0_i32 = arith.constant 0 : i32
    %c0_i32_0 = arith.constant 0 : i32
    %c0_i32_1 = arith.constant 0 : i32
    return %arg0, %c0_i32, %c0_i32_0 : i32, i32, i32
  }
  func.func @transform_7(%arg0: i32, %arg1: i32) -> (i32, i32, i32, i32) {
    %c0_i32 = arith.constant 0 : i32
    %c0_i32_0 = arith.constant 0 : i32
    %c0_i32_1 = arith.constant 0 : i32
    return %arg0, %arg1, %c0_i32, %c0_i32_0 : i32, i32, i32, i32
  }
}

</mosaic_0001>

<llo_original>
// kernel: tpu_custom_call.1
$region0: #{tpu_custom_call.1}
  #allocation0 [shape = 'u32[]', space=smem, size = 0x4, offset = 0x4, fixed_abs, tag = 'smem constant byte address 0x4 - core index']
  #allocation1 [shape = 'u32[72,128]{1,0:T(1,128)}', space=vmem, size = 0x9000, scoped, tag = 'internal scratch']
  #allocation2 [shape = 'bf16[1,8,128]{2,1,0:T(8,128)(2,1)}', space=vmem, size = 0x800, scoped, tag = 'scratch operand']
  #allocation3 [shape = 'bf16[1,8,128]{2,1,0:T(8,128)(2,1)}', space=vmem, size = 0x800, scoped, tag = 'scratch operand']
  #allocation4 [shape = 'f32[8,8]{1,0:T(8,128)}', space=vmem, size = 0x1000, scoped, tag = 'scratch operand']
  %s0 = inlined_call_operand.vmem [shape: bf16[2,8,32], index: 0, kind: input, shape index: {}]
  %s1 = inlined_call_operand.hbm [shape: bf16[32,256], index: 1, kind: input, shape index: {}]
  %s2 = inlined_call_operand.vmem [shape: f32[1,256], index: 2, kind: input, shape index: {}]
  %s3 = inlined_call_operand.vmem [shape: f32[8,128], index: 3, kind: input, shape index: {}]
  %s4 = inlined_call_operand.hbm [shape: f32[8,128], index: 4, kind: input, shape index: {}]
  %s5 = inlined_call_operand.vmem [shape: f32[2,1,8], index: 5, kind: input, shape index: {}]
  %s6 = inlined_call_operand.vmem [shape: f32[2,8,1], index: 6, kind: input, shape index: {}]
  %s7 = inlined_call_operand.hbm [shape: f32[2,4,8,8], index: 7, kind: output, shape index: {}]
  %s8 = sld [smem:[#allocation0]]
  $region73: #{tpu_custom_call.1} parent=0
    _
  %s10 = ssub.s32 1, %s8
  %s11 = scalar_select 0, %s10, %s8
  $region1: #{tpu_custom_call.1} parent=0
    #allocation5 [shape = 'u8[16384]{0}', space=vmem, size = 0x4000, scoped, tag = 'input window, operand 1, single buffered']
    #allocation6 [shape = 's32[2]{0}', space=sflag, size = 0x8, scoped, tag = 'scoped memory for tpu_custom_call.1']
    #allocation7 [shape = 's32[2]{0}', space=sflag, size = 0x8, scoped, tag = 'scoped memory for tpu_custom_call.1']
    #allocation8 [shape = 'u8[4096]{0}', space=vmem, size = 0x1000, scoped, tag = 'input window, operand 4, single buffered']
    #allocation9 [shape = 's32[1]{0}', space=sflag, size = 0x4, scoped, tag = 'scoped memory for tpu_custom_call.1']
    #allocation10 [shape = 'u8[32768]{0}', space=vmem, size = 0x8000, scoped, tag = 'output window, operand 0']
    %12 = vsyncpa [#allocation6], 0
    %13 = vsyncpa [#allocation9], 0
    %14 = vsyncpa [#allocation7], 0
    %s15 = scalar_lea.sflag [#allocation7], 1
    %16 = vsyncpa %s15, 0
    loop: start=0, step=1, limit=4
    $region2: #{tpu_custom_call.1} parent=1 // loop_pre_header
      _
    $region3: #{tpu_custom_call.1} parent=1 // loop_header
      %s18 = sphi 0, %s22
      %p19 = scmp.ge.s32.totalorder %s18, 4
      %s25 = sphi 0, %s37
      %s26 = sphi 0, %s33
      %s27 = sphi 0, %s25
      %s28 = sphi 0, %s26
      %s29 = sphi 0, %s27
      %s30 = sphi 0, %s28
      %s40 = sphi 0, %s42
      %s43 = sphi 0, %s40
      %s44 = sphi 0, %s43
      %s60 = sphi 0, %s44
      %s64 = sphi 0, %s64
      %s66 = sphi 0, %s64
      %s67 = sphi 0, %s66
      %s81 = sphi 0, %s67
      %s85 = sphi 0, %s85
      %s87 = sphi 0, %s85
      %s88 = sphi 0, %s87
      %s102 = sphi 0, %s88
      %s106 = sphi 0, %s106
      %s108 = sphi 0, %s106
      %s109 = sphi 0, %s108
      %s123 = sphi 0, %s109
      %s127 = sphi 0, %s127
      %s129 = sphi 0, %s127
      %s130 = sphi 0, %s129
      %s144 = sphi 0, %s130
      %s150 = sphi 0, %s152
      %s153 = sphi 0, %s150
      %s154 = sphi 0, %s153
      %s170 = sphi 0, %s154
      %s176 = sphi 0, %s178
      %s179 = sphi 0, %s176
      %s180 = sphi 0, %s179
      %s196 = sphi 0, %s180
      %s204 = sphi 0, %s206
      %s207 = sphi 0, %s204
      %s208 = sphi 0, %s207
      %s224 = sphi 0, %s208
    $region4: #{tpu_custom_call.1} parent=1 // loop_header_branch
      %21 = sbr.rel (%p19) target = $region8
    $region5: #{tpu_custom_call.1} parent=1 // loop_body
      %s23 = ssub.s32 %s18, 1
      %s24 = ssub.s32 %s18, 2
      %s31 = sadd.s32 1, %s26
      %p32 = scmp.ge.s32.totalorder %s31, 1
      %s33 = scalar_select %p32, 0, %s31
      %s34 = sadd.s32 1, %s25
      %s35 = scalar_select %p32, %s34, %s25
      %p36 = scmp.ge.s32.totalorder %s35, 2
      %s37 = scalar_select %p36, 0, %s35
      %s38 = ssub.s32 %s25, %s37
      %p39 = scmp.eq.s32.totalorder %s38, 0
      %s41 = sadd.s32 %s40, 1
      %s42 = scalar_select %p39, %s40, %s41
      %p45 = pneg %p39
      %p46 = scmp.eq.s32.totalorder %s18, 1
      %p47 = por %p45, %p46
      %p48 = scmp.ne.s32.totalorder %s40, %s43
      %p49 = scmp.eq.s32.totalorder %s18, 0
      %p50 = por %p48, %p49
      %p51 = scmp.ne.s32.totalorder %s40, %s43
      %p52 = scmp.eq.s32.totalorder %s23, 1
      %p53 = por %p51, %p52
      %p54 = scmp.ne.s32.totalorder %s43, %s44
      %p55 = scmp.eq.s32.totalorder %s23, 0
      %p56 = por %p54, %p55
      %p57 = scmp.ne.s32.totalorder %s43, %s44
      %p58 = scmp.eq.s32.totalorder %s24, 1
      %p59 = por %p57, %p58
      %p61 = scmp.ne.s32.totalorder %s44, %s60
      %p62 = scmp.eq.s32.totalorder %s24, 0
      %p63 = por %p61, %p62
      %s65 = sadd.s32 %s64, 1
      %p68 = scmp.eq.s32.totalorder %s18, 1
      %p69 = scmp.ne.s32.totalorder %s64, %s66
      %p70 = scmp.eq.s32.totalorder %s18, 0
      %p71 = por %p69, %p70
      %p72 = scmp.ne.s32.totalorder %s64, %s66
      %p73 = scmp.eq.s32.totalorder %s23, 1
      %p74 = por %p72, %p73
      %p75 = scmp.ne.s32.totalorder %s66, %s67
      %p76 = scmp.eq.s32.totalorder %s23, 0
      %p77 = por %p75, %p76
      %p78 = scmp.ne.s32.totalorder %s66, %s67
      %p79 = scmp.eq.s32.totalorder %s24, 1
      %p80 = por %p78, %p79
      %p82 = scmp.ne.s32.totalorder %s67, %s81
      %p83 = scmp.eq.s32.totalorder %s24, 0
      %p84 = por %p82, %p83
      %s86 = sadd.s32 %s85, 1
      %p89 = scmp.eq.s32.totalorder %s18, 1
      %p90 = scmp.ne.s32.totalorder %s85, %s87
      %p91 = scmp.eq.s32.totalorder %s18, 0
      %p92 = por %p90, %p91
      %p93 = scmp.ne.s32.totalorder %s85, %s87
      %p94 = scmp.eq.s32.totalorder %s23, 1
      %p95 = por %p93, %p94
      %p96 = scmp.ne.s32.totalorder %s87, %s88
      %p97 = scmp.eq.s32.totalorder %s23, 0
      %p98 = por %p96, %p97
      %p99 = scmp.ne.s32.totalorder %s87, %s88
      %p100 = scmp.eq.s32.totalorder %s24, 1
      %p101 = por %p99, %p100
      %p103 = scmp.ne.s32.totalorder %s88, %s102
      %p104 = scmp.eq.s32.totalorder %s24, 0
      %p105 = por %p103, %p104
      %s107 = sadd.s32 %s106, 1
      %p110 = scmp.eq.s32.totalorder %s18, 1
      %p111 = scmp.ne.s32.totalorder %s106, %s108
      %p112 = scmp.eq.s32.totalorder %s18, 0
      %p113 = por %p111, %p112
      %p114 = scmp.ne.s32.totalorder %s106, %s108
      %p115 = scmp.eq.s32.totalorder %s23, 1
      %p116 = por %p114, %p115
      %p117 = scmp.ne.s32.totalorder %s108, %s109
      %p118 = scmp.eq.s32.totalorder %s23, 0
      %p119 = por %p117, %p118
      %p120 = scmp.ne.s32.totalorder %s108, %s109
      %p121 = scmp.eq.s32.totalorder %s24, 1
      %p122 = por %p120, %p121
      %p124 = scmp.ne.s32.totalorder %s109, %s123
      %p125 = scmp.eq.s32.totalorder %s24, 0
      %p126 = por %p124, %p125
      %s128 = sadd.s32 %s127, 1
      %p131 = scmp.eq.s32.totalorder %s18, 1
      %p132 = scmp.ne.s32.totalorder %s127, %s129
      %p133 = scmp.eq.s32.totalorder %s18, 0
      %p134 = por %p132, %p133
      %p135 = scmp.ne.s32.totalorder %s127, %s129
      %p136 = scmp.eq.s32.totalorder %s23, 1
      %p137 = por %p135, %p136
      %p138 = scmp.ne.s32.totalorder %s129, %s130
      %p139 = scmp.eq.s32.totalorder %s23, 0
      %p140 = por %p138, %p139
      %p141 = scmp.ne.s32.totalorder %s129, %s130
      %p142 = scmp.eq.s32.totalorder %s24, 1
      %p143 = por %p141, %p142
      %p145 = scmp.ne.s32.totalorder %s130, %s144
      %p146 = scmp.eq.s32.totalorder %s24, 0
      %p147 = por %p145, %p146
      %s148 = ssub.s32 %s25, %s37
      %p149 = scmp.eq.s32.totalorder %s148, 0
      %s151 = sadd.s32 %s150, 1
      %s152 = scalar_select %p149, %s150, %s151
      %p155 = pneg %p149
      %p156 = scmp.eq.s32.totalorder %s18, 1
      %p157 = por %p155, %p156
      %p158 = scmp.ne.s32.totalorder %s150, %s153
      %p159 = scmp.eq.s32.totalorder %s18, 0
      %p160 = por %p158, %p159
      %p161 = scmp.ne.s32.totalorder %s150, %s153
      %p162 = scmp.eq.s32.totalorder %s23, 1
      %p163 = por %p161, %p162
      %p164 = scmp.ne.s32.totalorder %s153, %s154
      %p165 = scmp.eq.s32.totalorder %s23, 0
      %p166 = por %p164, %p165
      %p167 = scmp.ne.s32.totalorder %s153, %s154
      %p168 = scmp.eq.s32.totalorder %s24, 1
      %p169 = por %p167, %p168
      %p171 = scmp.ne.s32.totalorder %s154, %s170
      %p172 = scmp.eq.s32.totalorder %s24, 0
      %p173 = por %p171, %p172
      %s174 = ssub.s32 %s25, %s37
      %p175 = scmp.eq.s32.totalorder %s174, 0
      %s177 = sadd.s32 %s176, 1
      %s178 = scalar_select %p175, %s176, %s177
      %p181 = pneg %p175
      %p182 = scmp.eq.s32.totalorder %s18, 1
      %p183 = por %p181, %p182
      %p184 = scmp.ne.s32.totalorder %s176, %s179
      %p185 = scmp.eq.s32.totalorder %s18, 0
      %p186 = por %p184, %p185
      %p187 = scmp.ne.s32.totalorder %s176, %s179
      %p188 = scmp.eq.s32.totalorder %s23, 1
      %p189 = por %p187, %p188
      %p190 = scmp.ne.s32.totalorder %s179, %s180
      %p191 = scmp.eq.s32.totalorder %s23, 0
      %p192 = por %p190, %p191
      %p193 = scmp.ne.s32.totalorder %s179, %s180
      %p194 = scmp.eq.s32.totalorder %s24, 1
      %p195 = por %p193, %p194
      %p197 = scmp.ne.s32.totalorder %s180, %s196
      %p198 = scmp.eq.s32.totalorder %s24, 0
      %p199 = por %p197, %p198
      %s200 = ssub.s32 %s25, %s37
      %s201 = ssub.s32 %s26, %s33
      %s202 = sor.u32 %s200, %s201
      %p203 = scmp.eq.s32.totalorder %s202, 0
      %s205 = sadd.s32 %s204, 1
      %s206 = scalar_select %p203, %s204, %s205
      %p209 = pneg %p203
      %p210 = scmp.eq.s32.totalorder %s18, 1
      %p211 = por %p209, %p210
      %p212 = scmp.ne.s32.totalorder %s204, %s207
      %p213 = scmp.eq.s32.totalorder %s18, 0
      %p214 = por %p212, %p213
      %p215 = scmp.ne.s32.totalorder %s204, %s207
      %p216 = scmp.eq.s32.totalorder %s23, 1
      %p217 = por %p215, %p216
      %p218 = scmp.ne.s32.totalorder %s207, %s208
      %p219 = scmp.eq.s32.totalorder %s23, 0
      %p220 = por %p218, %p219
      %p221 = scmp.ne.s32.totalorder %s207, %s208
      %p222 = scmp.eq.s32.totalorder %s24, 1
      %p223 = por %p221, %p222
      %p225 = scmp.ne.s32.totalorder %s208, %s224
      %p226 = scmp.eq.s32.totalorder %s24, 0
      %p227 = por %p225, %p226
      %p228 = scmp.le.s32.totalorder 1, %s18
      %p229 = scmp.lt.s32.totalorder %s18, 3
      %p230 = pnand %p228, %p229
      %p231 = pneg %p230
      // Predicated region
      $region9: #{tpu_custom_call.1} parent=5 // pred_check
        _
      $region10: #{tpu_custom_call.1} parent=5 // pred_check_branch
        %233 = sbr.rel (%p230) target = $region12
      $region11: #{tpu_custom_call.1} parent=5 // pred_region
        %s234 = ssub.s32 %s18, 1
        // Predicated region
        $region13: #{tpu_custom_call.1} parent=11 // pred_check
          %p235 = pneg %p77
        $region14: #{tpu_custom_call.1} parent=11 // pred_check_branch
          %237 = sbr.rel (%p235) target = $region16
        $region15: #{tpu_custom_call.1} parent=11 // pred_region
          %239 = vsyncadd [#allocation6], 0
          %s240 = sshll.u32 %s1, 4
          %s241 = int_to_ptr.hbm [resolvable:$true] %s240
          %s242 = sshll.u32 [#allocation5], 4
          %s243 = int_to_ptr.vmem [resolvable:$true] %s242
          %248 = dma.hbm_to_vmem [thread:$0]  %s241, 512, %s243, [#allocation6], 128, 128, 8
        $region16: #{tpu_custom_call.1} parent=11 // pred_fallthru
          _
        // Predicated region
        $region17: #{tpu_custom_call.1} parent=11 // pred_check
          %p249 = pneg %p98
        $region18: #{tpu_custom_call.1} parent=11 // pred_check_branch
          %251 = sbr.rel (%p249) target = $region20
        $region19: #{tpu_custom_call.1} parent=11 // pred_region
          _
        $region20: #{tpu_custom_call.1} parent=11 // pred_fallthru
          _
        // Predicated region
        $region21: #{tpu_custom_call.1} parent=11 // pred_check
          %p252 = pneg %p119
        $region22: #{tpu_custom_call.1} parent=11 // pred_check_branch
          %254 = sbr.rel (%p252) target = $region24
        $region23: #{tpu_custom_call.1} parent=11 // pred_region
          _
        $region24: #{tpu_custom_call.1} parent=11 // pred_fallthru
          _
        // Predicated region
        $region25: #{tpu_custom_call.1} parent=11 // pred_check
          %p255 = pneg %p140
        $region26: #{tpu_custom_call.1} parent=11 // pred_check_branch
          %257 = sbr.rel (%p255) target = $region28
        $region27: #{tpu_custom_call.1} parent=11 // pred_region
          %259 = vsyncadd [#allocation9], 0
          %s261 = sshll.u32 %s4, 4
          %s262 = int_to_ptr.hbm [resolvable:$true] %s261
          %s263 = sshll.u32 [#allocation8], 4
          %s264 = int_to_ptr.vmem [resolvable:$true] %s263
          %266 = dma.hbm_to_vmem [thread:$0]  %s262, 128, %s264, [#allocation9]
        $region28: #{tpu_custom_call.1} parent=11 // pred_fallthru
          _
      $region12: #{tpu_custom_call.1} parent=5 // pred_fallthru
        _
      %p267 = scmp.lt.s32.totalorder %s18, 2
      // Predicated region
      $region29: #{tpu_custom_call.1} parent=5 // pred_check
        %p268 = pneg %p267
      $region30: #{tpu_custom_call.1} parent=5 // pred_check_branch
        %270 = sbr.rel (%p268) target = $region32
      $region31: #{tpu_custom_call.1} parent=5 // pred_region
        // Predicated region
        $region33: #{tpu_custom_call.1} parent=31 // pred_check
          %p271 = pneg %p50
        $region34: #{tpu_custom_call.1} parent=31 // pred_check_branch
          %273 = sbr.rel (%p271) target = $region36
        $region35: #{tpu_custom_call.1} parent=31 // pred_region
          %p274 = scmp.lt.s32.totalorder %s25, 1
          %s275 = scalar_select %p274, %s25, 1
          %s276 = smul.addr %s275, 4
          %s277 = scalar_lea.vmem %s0, %s276
        $region36: #{tpu_custom_call.1} parent=31 // pred_fallthru
          _
        // Predicated region
        $region37: #{tpu_custom_call.1} parent=31 // pred_check
          %p278 = pneg %p160
        $region38: #{tpu_custom_call.1} parent=31 // pred_check_branch
          %280 = sbr.rel (%p278) target = $region40
        $region39: #{tpu_custom_call.1} parent=31 // pred_region
          %p281 = scmp.lt.s32.totalorder %s25, 1
          %s282 = scalar_select %p281, %s25, 1
          %s283 = scalar_lea.vmem %s5, %s282
        $region40: #{tpu_custom_call.1} parent=31 // pred_fallthru
          _
        // Predicated region
        $region41: #{tpu_custom_call.1} parent=31 // pred_check
          %p284 = pneg %p186
        $region42: #{tpu_custom_call.1} parent=31 // pred_check_branch
          %286 = sbr.rel (%p284) target = $region44
        $region43: #{tpu_custom_call.1} parent=31 // pred_region
          %p287 = scmp.lt.s32.totalorder %s25, 1
          %s288 = scalar_select %p287, %s25, 1
          %s289 = smul.addr %s288, 8
          %s290 = scalar_lea.vmem %s6, %s289
        $region44: #{tpu_custom_call.1} parent=31 // pred_fallthru
          _
      $region32: #{tpu_custom_call.1} parent=5 // pred_fallthru
        _
      %p291 = scmp.le.s32.totalorder 1, %s18
      %p292 = scmp.lt.s32.totalorder %s18, 3
      %p293 = pnand %p291, %p292
      %p294 = pneg %p293
      // Predicated region
      $region45: #{tpu_custom_call.1} parent=5 // pred_check
        _
      $region46: #{tpu_custom_call.1} parent=5 // pred_check_branch
        %296 = sbr.rel (%p293) target = $region48
      $region47: #{tpu_custom_call.1} parent=5 // pred_region
        %s297 = ssub.s32 %s18, 1
        // Predicated region
        $region49: #{tpu_custom_call.1} parent=47 // pred_check
          %p298 = pneg %p77
        $region50: #{tpu_custom_call.1} parent=47 // pred_check_branch
          %300 = sbr.rel (%p298) target = $region52
        $region51: #{tpu_custom_call.1} parent=47 // pred_region
          %302 = dma.done [#allocation6], 512
        $region52: #{tpu_custom_call.1} parent=47 // pred_fallthru
          _
        // Predicated region
        $region53: #{tpu_custom_call.1} parent=47 // pred_check
          %p303 = pneg %p140
        $region54: #{tpu_custom_call.1} parent=47 // pred_check_branch
          %305 = sbr.rel (%p303) target = $region56
        $region55: #{tpu_custom_call.1} parent=47 // pred_region
          %307 = dma.done [#allocation9], 128
        $region56: #{tpu_custom_call.1} parent=47 // pred_fallthru
          _
        %p308 = scmp.lt.s32.totalorder %s27, 1
        %s309 = scalar_select %p308, %s27, 1
        %s310 = smul.addr %s309, 4
        %s311 = scalar_lea.vmem %s0, %s310
        %p312 = pneg %p56
        %p313 = pneg %p53
        %p314 = pneg %p77
        %p315 = pneg %p74
        %p316 = pneg %p98
        %p317 = pneg %p95
        %p318 = pneg %p119
        %p319 = pneg %p116
        %p320 = pneg %p140
        %p321 = pneg %p137
        %p322 = scmp.lt.s32.totalorder %s27, 1
        %s323 = scalar_select %p322, %s27, 1
        %s324 = scalar_lea.vmem %s5, %s323
        %p325 = pneg %p166
        %p326 = pneg %p163
        %p327 = scmp.lt.s32.totalorder %s27, 1
        %s328 = scalar_select %p327, %s27, 1
        %s329 = smul.addr %s328, 8
        %s330 = scalar_lea.vmem %s6, %s329
        %p331 = pneg %p192
        %p332 = pneg %p189
        %p333 = pneg %p220
        %p334 = pneg %p217
        %s335 = sand.u32 %s207, 1
        %s336 = scalar_lea.sflag [#allocation7], %s335
        %s337 = sand.u32 %s207, 1
        %s338 = smul.addr %s337, 32
        %s339 = scalar_lea.vmem [#allocation10], %s338
        %p340 = scmp.lt.s32.totalorder %s27, 1
        %s341 = scalar_select %p340, %s27, 1
        %s342 = smul.addr %s341, 4
        %s343 = scalar_lea.vmem %s0, %s342
        %p344 = scmp.lt.s32.totalorder %s27, 1
        %s345 = scalar_select %p344, %s27, 1
        %s346 = scalar_lea.vmem %s5, %s345
        %p347 = scmp.lt.s32.totalorder %s27, 1
        %s348 = scalar_select %p347, %s27, 1
        %s349 = smul.addr %s348, 8
        %s350 = scalar_lea.vmem %s6, %s349
        %s351 = smul.u32 4, %s28
        %p353 = scmp.eq.s32.totalorder %s28, 0
        // Predicated region
        $region57: #{tpu_custom_call.1} parent=47 // pred_check
          %p354 = pneg %p353
        $region58: #{tpu_custom_call.1} parent=47 // pred_check_branch
          %356 = sbr.rel (%p354) target = $region60
        $region59: #{tpu_custom_call.1} parent=47 // pred_region
          %v357 = vld [vmem:[%s343] sm:$0xf]
          %v358 = vld [vmem:[#allocation5] sm:$0xff]
          %v359 = vld [vmem:[#allocation5 + $0x8] sm:$0xff]
          %v360 = vld [vmem:[#allocation5 + $0x10] sm:$0xff]
          %v361 = vld [vmem:[#allocation5 + $0x18] sm:$0xff]
          %v362 = vld [vmem:[%s2] sm:$0x3]
          %v364 = vperm.slane %v362, 0
          %v365 = vperm.slane %v362, 1
          %v372 = vunpack.c.l.b16 %v358
          %v373 = vunpack.c.h.b16 %v358
          %v374 = vunpack.c.l.b16 %v359
          %v375 = vunpack.c.h.b16 %v359
          %v376 = vunpack.c.l.b16 %v360
          %v377 = vunpack.c.h.b16 %v360
          %v378 = vunpack.c.l.b16 %v361
          %v379 = vunpack.c.h.b16 %v361
          %v380 = vpack.c.b16 %v374, %v372
          %v381 = vpack.c.b16 %v375, %v373
          %v382 = vpack.c.b16 %v378, %v376
          %v383 = vpack.c.b16 %v379, %v377
          %vm388 = vcmask 261120
          %v390 = vsel %vm388, %v357, 0
          %392 = vmatpush.bf16.msra.mxu0 0
          %393 = vmatpush.bf16.msra.mxu0 0
          %394 = vmatpush.bf16.msra.mxu0 0
          %395 = vmatpush.bf16.msra.mxu0 0
          %396 = vmatpush.bf16.msra.mxu0 0
          %397 = vmatpush.bf16.msra.mxu0 0
          %398 = vmatpush.bf16.msra.mxu0 %v382
          %399 = vmatpush.bf16.msra.mxu0 %v380
          %400 = vmatmul.bf16.gmra.mxu0 %v390
          %v401 = vpop.f32.mrf.mxu0
          %v402 = vadd.f32 %v364, %v401
          %v403 = vpop.f32.mrf.mxu0
          %404 = vdwg.mxu0
          %405 = vmatpush.bf16.msra.mxu0 0
          %406 = vmatpush.bf16.msra.mxu0 0
          %407 = vmatpush.bf16.msra.mxu0 0
          %408 = vmatpush.bf16.msra.mxu0 0
          %409 = vmatpush.bf16.msra.mxu0 0
          %410 = vmatpush.bf16.msra.mxu0 0
          %411 = vmatpush.bf16.msra.mxu0 %v383
          %412 = vmatpush.bf16.msra.mxu0 %v381
          %413 = vmatmul.bf16.gmra.mxu0 %v390
          %v414 = vpop.f32.mrf.mxu0
          %v415 = vadd.f32 %v365, %v414
          %v416 = vpop.f32.mrf.mxu0
          %417 = vdwg.mxu0
          %v418 = vld [vmem:[%s3] sm:$0xff]
          %v419 = vld [vmem:[#allocation8] sm:$0xff]
          %v420 = vlaneseq
          %v421 = vand.u32 %v420, 127
          %vm422 = vcmp.lt.s32.totalorder %v421, 0
          %v423 = vsub.s32 0, %v421
          %v424 = vsel %vm422, %v423, %v421
          %v425 = vshrl.u32 %v424, 1
          %v426 = vand.u32 %v424, 1
          %v427 = vsub.s32 0, %v426
          %v428 = vsel %vm422, %v427, %v426
          %vm429 = vcmp.ne.s32.totalorder %v428, 0
          %vm430 = vcmp.lt.s32.totalorder %v428, 0
          %vm431 = vmand %vm430, %vm429
          %v432 = vadd.s32 %v428, 2
          %v433 = vsel %vm431, %v432, %v428
          %vm434 = vcmp.eq.s32.totalorder %v433, 0
          %v435 = vld [vmem:[%s346] sm:$0x1]
          %v436 = vld [vmem:[%s350] sm:$0xff]
          %v437 = vmul.f32 %v402, %v418
          %438 = vrot.lane.b32.xlu0 %v402, 127
          %v439 = vpop.permute.xlu0 %438
          %440 = vrot.lane.b32.xlu0 %v402, 1
          %v441 = vpop.permute.xlu0 %440
          %v442 = vsub.f32 0.0, %v439
          %v443 = vsel %vm434, %v442, %v441
          %v444 = vmul.f32 %v443, %v419
          %v445 = vadd.f32 %v437, %v444
          %v446 = vmul.f32 %v445, 0.17677669
          %v447 = vmul.f32 %v415, %v418
          %448 = vrot.lane.b32.xlu0 %v415, 127
          %v449 = vpop.permute.xlu0 %448
          %450 = vrot.lane.b32.xlu0 %v415, 1
          %v451 = vpop.permute.xlu0 %450
          %v452 = vsub.f32 0.0, %v449
          %v453 = vsel %vm434, %v452, %v451
          %v454 = vmul.f32 %v453, %v419
          %v455 = vadd.f32 %v447, %v454
          %457 = vset.pattern.permute.xlu0 0
          %458 = vperm.xlu0 %457, %v436
          %v459 = vpop.permute.xlu0 %458
          %v461 = vmul.f32 %v455, %v459
          %v462 = vpack.c.bf16 %v446, %v446
          %463 = vst [vmem:[#allocation2] sm:$0xf] %v462
          %v464 = vpack.c.bf16 %v461, %v461
          %465 = vst [vmem:[#allocation3] sm:$0xf] %v464
          %v466 = vlaneseq
          %v467 = vshrl.u32 %v466, 7
          %vm468 = vcmp.gt.s32.totalorder %v467, %v421
          %v469 = vsel %vm468, 1, 0
          %v470 = vcvt.s32.f32 %v469
          %v471 = vsub.f32 1.0, %v435
          %v473 = vperm.slane %v471, 0
          %v475 = vadd.f32 %v473, %v470
          %v476 = vmul.f32 %v475, 1.7677669e+11
          %vm477 = vcmask 64512
          %478 = vst.msk [vmem:[#allocation4] sm:$0xff] %vm477, %v476
        $region60: #{tpu_custom_call.1} parent=47 // pred_fallthru
          _
        %s479 = smul.addr %s28, 4
        %s480 = scalar_lea.vmem [#allocation2], %s479
        %v481 = vld [vmem:[%s480] sm:$0xf]
        %s482 = smul.addr %s28, 4
        %s483 = scalar_lea.vmem [#allocation3], %s482
        %v484 = vld [vmem:[%s483] sm:$0xf]
        %v485 = vld [vmem:[#allocation4] sm:$0xff]
        %vm486 = vcmask 261120
        %v488 = vsel %vm486, %v481, 0
        %v491 = vsel %vm486, %v484, 0
        %493 = vmatpush.bf16.xpose.msra.mxu0 0
        %494 = vmatpush.bf16.xpose.msra.mxu0 0
        %495 = vmatpush.bf16.xpose.msra.mxu0 0
        %496 = vmatpush.bf16.xpose.msra.mxu0 0
        %497 = vmatpush.bf16.xpose.msra.mxu0 0
        %498 = vmatpush.bf16.xpose.msra.mxu0 0
        %499 = vmatpush.bf16.xpose.msra.mxu0 0
        %500 = vmatpush.bf16.xpose.msra.mxu0 %v491
        %501 = vmatmul.bf16.gmra.mxu0 %v488
        %v502 = vpop.f32.mrf.mxu0
        %v503 = vadd.f32 0.0, %v502
        %v504 = vpop.f32.mrf.mxu0
        %505 = vdwg.mxu0
        %v506 = vsub.f32 %v503, %v485
        %vm507 = vcmask 64512
        %508 = vst.msk [vmem:[%s339] sm:$0xff] %vm507, %v506
        %v510 = vunpack.c.l.b16 %v481
        %v511 = vpack.c.b16 %v510, %v510
        %512 = vrot.lane.b32.xlu0 %v511, 96
        %v513 = vpop.permute.xlu0 %512
        %v515 = vunpack.c.l.b16 %v484
        %v516 = vpack.c.b16 %v515, %v515
        %517 = vrot.lane.b32.xlu0 %v516, 96
        %v518 = vpop.permute.xlu0 %517
        %v520 = vsel %vm486, %v513, 0
        %v523 = vsel %vm486, %v518, 0
        %525 = vmatpush.bf16.xpose.msra.mxu0 0
        %526 = vmatpush.bf16.xpose.msra.mxu0 0
        %527 = vmatpush.bf16.xpose.msra.mxu0 0
        %528 = vmatpush.bf16.xpose.msra.mxu0 0
        %529 = vmatpush.bf16.xpose.msra.mxu0 0
        %530 = vmatpush.bf16.xpose.msra.mxu0 0
        %531 = vmatpush.bf16.xpose.msra.mxu0 0
        %532 = vmatpush.bf16.xpose.msra.mxu0 %v523
        %533 = vmatmul.bf16.gmra.mxu0 %v520
        %v534 = vpop.f32.mrf.mxu0
        %v535 = vadd.f32 0.0, %v534
        %v536 = vpop.f32.mrf.mxu0
        %537 = vdwg.mxu0
        %v538 = vsub.f32 %v535, %v485
        %s539 = scalar_lea.vmem %s339, 8 [#allocation10]
        %540 = vst.msk [vmem:[%s539] sm:$0xff] %vm507, %v538
        %541 = vrot.lane.b32.xlu0 %v511, 64
        %v542 = vpop.permute.xlu0 %541
        %543 = vrot.lane.b32.xlu0 %v516, 64
        %v544 = vpop.permute.xlu0 %543
        %v546 = vsel %vm486, %v542, 0
        %v549 = vsel %vm486, %v544, 0
        %551 = vmatpush.bf16.xpose.msra.mxu0 0
        %552 = vmatpush.bf16.xpose.msra.mxu0 0
        %553 = vmatpush.bf16.xpose.msra.mxu0 0
        %554 = vmatpush.bf16.xpose.msra.mxu0 0
        %555 = vmatpush.bf16.xpose.msra.mxu0 0
        %556 = vmatpush.bf16.xpose.msra.mxu0 0
        %557 = vmatpush.bf16.xpose.msra.mxu0 0
        %558 = vmatpush.bf16.xpose.msra.mxu0 %v549
        %559 = vmatmul.bf16.gmra.mxu0 %v546
        %v560 = vpop.f32.mrf.mxu0
        %v561 = vadd.f32 0.0, %v560
        %v562 = vpop.f32.mrf.mxu0
        %563 = vdwg.mxu0
        %v564 = vsub.f32 %v561, %v485
        %s565 = scalar_lea.vmem %s339, 16 [#allocation10]
        %566 = vst.msk [vmem:[%s565] sm:$0xff] %vm507, %v564
        %567 = vrot.lane.b32.xlu0 %v511, 32
        %v568 = vpop.permute.xlu0 %567
        %569 = vrot.lane.b32.xlu0 %v516, 32
        %v570 = vpop.permute.xlu0 %569
        %v572 = vsel %vm486, %v568, 0
        %v575 = vsel %vm486, %v570, 0
        %577 = vmatpush.bf16.xpose.msra.mxu0 0
        %578 = vmatpush.bf16.xpose.msra.mxu0 0
        %579 = vmatpush.bf16.xpose.msra.mxu0 0
        %580 = vmatpush.bf16.xpose.msra.mxu0 0
        %581 = vmatpush.bf16.xpose.msra.mxu0 0
        %582 = vmatpush.bf16.xpose.msra.mxu0 0
        %583 = vmatpush.bf16.xpose.msra.mxu0 0
        %584 = vmatpush.bf16.xpose.msra.mxu0 %v575
        %585 = vmatmul.bf16.gmra.mxu0 %v572
        %v586 = vpop.f32.mrf.mxu0
        %v587 = vadd.f32 0.0, %v586
        %v588 = vpop.f32.mrf.mxu0
        %589 = vdwg.mxu0
        %v590 = vsub.f32 %v587, %v485
        %s591 = scalar_lea.vmem %s339, 24 [#allocation10]
        %592 = vst.msk [vmem:[%s591] sm:$0xff] %vm507, %v590
        %s593 = sand.u32 %s207, 1
        %s594 = scalar_lea.sflag [#allocation7], %s593
        %s595 = sand.u32 %s207, 1
        %s596 = smul.addr %s595, 32
        %s597 = scalar_lea.vmem [#allocation10], %s596
        // Predicated region
        $region61: #{tpu_custom_call.1} parent=47 // pred_check
          %p598 = pneg %p217
        $region62: #{tpu_custom_call.1} parent=47 // pred_check_branch
          %600 = sbr.rel (%p598) target = $region64
        $region63: #{tpu_custom_call.1} parent=47 // pred_region
          %s601 = smul.u32 4, %s28
          %603 = vsyncadd %s594, 0
          %s604 = smul.addr %s27, 4
          %s605 = sadd.s32 %s601, %s604
          %s606 = smul.addr %s605, 8
          %s607 = scalar_lea.hbm %s7, %s606
          %s608 = sshll.u32 %s597, 4
          %s609 = int_to_ptr.vmem [resolvable:$true] %s608
          %s610 = sshll.u32 %s607, 4
          %s611 = int_to_ptr.hbm [resolvable:$true] %s610
          %616 = dma.vmem_to_hbm [thread:$0]  %s609, 512, %s611, %s594, 128, 128, 8
        $region64: #{tpu_custom_call.1} parent=47 // pred_fallthru
          _
      $region48: #{tpu_custom_call.1} parent=5 // pred_fallthru
        _
      %p617 = scmp.le.s32.totalorder 2, %s18
      // Predicated region
      $region65: #{tpu_custom_call.1} parent=5 // pred_check
        %p618 = pneg %p617
      $region66: #{tpu_custom_call.1} parent=5 // pred_check_branch
        %620 = sbr.rel (%p618) target = $region68
      $region67: #{tpu_custom_call.1} parent=5 // pred_region
        %s621 = ssub.s32 %s18, 2
        // Predicated region
        $region69: #{tpu_custom_call.1} parent=67 // pred_check
          %p622 = pneg %p223
        $region70: #{tpu_custom_call.1} parent=67 // pred_check_branch
          %624 = sbr.rel (%p622) target = $region72
        $region71: #{tpu_custom_call.1} parent=67 // pred_region
          %s625 = sand.u32 %s208, 1
          %s626 = scalar_lea.sflag [#allocation7], %s625
          %s627 = sand.u32 %s208, 1
          %s628 = smul.addr %s627, 32
          %s629 = scalar_lea.vmem [#allocation10], %s628
          %631 = dma.done %s626, 512
        $region72: #{tpu_custom_call.1} parent=67 // pred_fallthru
          _
      $region68: #{tpu_custom_call.1} parent=5 // pred_fallthru
        _
    $region6: #{tpu_custom_call.1} parent=1 // loop_footer
      %s22 = sadd.s32 1, %s18
    $region7: #{tpu_custom_call.1} parent=1 // loop_footer_branch
      %17 = sbr.rel target = $region3
    $region8: #{tpu_custom_call.1} parent=1 // loop_exit
      _
    %632 = vsyncpa [#allocation6], 1
    %s633 = scalar_lea.sflag [#allocation6], 1
    %634 = vsyncpa %s633, 1
    %635 = vsyncpa [#allocation9], 1
    %636 = vsyncpa [#allocation7], 1
    %s637 = scalar_lea.sflag [#allocation7], 1
    %638 = vsyncpa %s637, 1

</llo_original>
